<compile_context>
chip_gen: v7x
topology: tpu7x:2x2x1
jax: 0.10.0
libtpu: 0.0.40
codegen_flags: <defaults>
</compile_context>

<pallas_src>
import functools

import jax
import jax.numpy as jnp
from jax import lax
from jax.experimental import pallas as pl
from jax.experimental.pallas import tpu as pltpu


def _round_up(a: int, m: int) -> int:
    return ((a + m - 1) // m) * m


def _fcn_cell_kernel(*refs, p: float, use_dropout: bool):
    if use_dropout:
        x_ref, bits_ref, w_ref, b_ref, o_ref = refs
    else:
        x_ref, w_ref, b_ref, o_ref = refs
        bits_ref = None

    x = x_ref[...]  # (TM, K), native dtype — no upcast before the MXU.

    if use_dropout:
        # keep w.p. (1 - p): uniform uint32 bits >= round(p * 2^32).
        threshold = jnp.uint32(min(int(round(p * (1 << 32))), (1 << 32) - 1))
        keep = bits_ref[...] >= threshold
        x = jnp.where(keep, x, jnp.zeros_like(x))

    # x (TM, K) . W (TN, K) contracted on K  ==  x @ W.T  -> (TM, TN), f32 acc.
    y = lax.dot_general(
        x, w_ref[...],
        dimension_numbers=(((1,), (1,)), ((), ())),
        preferred_element_type=jnp.float32)

    if use_dropout:
        # Inverted-dropout scale folded into the (TM, TN) output tile
        # instead of the full (TM, K) input tile.
        y = y * jnp.float32(1.0 / (1.0 - p))

    y = y + b_ref[...].astype(jnp.float32)
    o_ref[...] = jnp.maximum(y, 0.0).astype(o_ref.dtype)


def fcn_cell(x, w, b, dropout_key, *, p=0.5, training=True, tm=256, tn=256):
    """x: (B, in_f), w: (out_f, in_f) [torch Linear layout], b: (out_f,)."""
    B, in_f = x.shape
    out_f = w.shape[0]
    use_dropout = bool(training) and p > 0.0
    if use_dropout:
        assert 0.0 < p < 1.0, "dropout p must be in (0, 1) when training"

    # Tile sizes: clamp to the problem, keep sublane/lane friendly.
    tm = max(8, min(int(tm), _round_up(B, 8)))
    tn = max(128, min(int(tn), _round_up(out_f, 128)))
    Bp = _round_up(B, tm)
    Np = _round_up(out_f, tn)

    # Pad to tile multiples (no-ops at the demo shapes).
    if Bp != B:
        x = jnp.pad(x, ((0, Bp - B), (0, 0)))
    if Np != out_f:
        w = jnp.pad(w, ((0, Np - out_f), (0, 0)))
        b = jnp.pad(b, (0, Np - out_f))
    b2 = b.reshape(1, Np)

    grid = (Bp // tm, Np // tn)

    in_specs = [pl.BlockSpec((tm, in_f), lambda i, j: (i, 0))]      # x
    args = [x]
    if use_dropout:
        bits = jax.random.bits(dropout_key, (Bp, in_f), dtype=jnp.uint32)
        in_specs.append(pl.BlockSpec((tm, in_f), lambda i, j: (i, 0)))
        args.append(bits)
    in_specs += [
        pl.BlockSpec((tn, in_f), lambda i, j: (j, 0)),              # W (torch layout)
        pl.BlockSpec((1, tn), lambda i, j: (0, j)),                 # bias row
    ]
    args += [w, b2]

    kernel = functools.partial(_fcn_cell_kernel,
                               p=float(p), use_dropout=use_dropout)

    out = pl.pallas_call(
        kernel,
        out_shape=jax.ShapeDtypeStruct((Bp, Np), x.dtype),
        grid_spec=pltpu.PrefetchScalarGridSpec(
            num_scalar_prefetch=0,
            grid=grid,
            in_specs=in_specs,
            out_specs=pl.BlockSpec((tm, tn), lambda i, j: (i, j)),
        ),
        compiler_params=pltpu.CompilerParams(
            dimension_semantics=("parallel", "parallel")),
    )(*args)

    if Bp != B or Np != out_f:
        out = out[:B, :out_f]
    return out


if __name__ == "__main__":
    key = jax.random.PRNGKey(0)
    k_x, k_w, k_b, k_drop = jax.random.split(key, 4)

    # Small but tile-friendly shapes: lane-dense out_f, 128-granular tiles.
    B, IN_F, OUT_F = 256, 128, 256
    P = 0.5

    x = jax.random.normal(k_x, (B, IN_F), dtype=jnp.float32)
    bound = 1.0 / (IN_F ** 0.5)   # PyTorch Linear init bounds
    w = jax.random.uniform(k_w, (OUT_F, IN_F), minval=-bound, maxval=bound,
                           dtype=jnp.float32)
    b = jax.random.uniform(k_b, (OUT_F,), minval=-bound, maxval=bound,
                           dtype=jnp.float32)

    # Training path (dropout active) — grid (2, 2) of 128x128 tiles.
    out = fcn_cell(x, w, b, k_drop, p=P, training=True, tm=128, tn=128)
    jax.block_until_ready(out)
    assert out.shape == (B, OUT_F)
    assert bool(jnp.all(out >= 0.0))

    # Exact reference for the training path (same bits -> same mask).
    bits = jax.random.bits(k_drop, (B, IN_F), dtype=jnp.uint32)
    thr = jnp.uint32(int(round(P * (1 << 32))))
    x_drop = jnp.where(bits >= thr, x, 0.0) * jnp.float32(1.0 / (1.0 - P))
    ref_train = jnp.maximum(x_drop @ w.T + b, 0.0)
    assert jnp.allclose(out, ref_train, atol=1e-3, rtol=1e-3)

    # Eval path (no dropout) vs plain JAX reference.
    out_eval = fcn_cell(x, w, b, k_drop, p=P, training=False, tm=128, tn=128)
    jax.block_until_ready(out_eval)
    ref_eval = jnp.maximum(x @ w.T + b, 0.0)
    assert jnp.allclose(out_eval, ref_eval, atol=1e-3, rtol=1e-3)

    print("KERNEL_OK")
</pallas_src>

<mosaic_0001>
module attributes {stable_mosaic.version = 11 : i64} {
  func.func @_fcn_cell_kernel(%arg0: i32, %arg1: i32, %arg2: memref<128x128xf32, #tpu.memory_space<vmem>>, %arg3: memref<128x128xi32, #tpu.memory_space<vmem>>, %arg4: memref<128x128xf32, #tpu.memory_space<vmem>>, %arg5: memref<1x128xf32, #tpu.memory_space<vmem>>, %arg6: memref<128x128xf32, #tpu.memory_space<vmem>>) attributes {dimension_semantics = [#tpu.dimension_semantics<parallel>, #tpu.dimension_semantics<parallel>], iteration_bounds = array<i64: 2, 2>, scalar_prefetch = 0 : i64, scratch_operands = 0 : i64, tpu.core_type = #tpu.core_type<tc>, window_params = [{transform_indices = @transform_0, window_bounds = array<i64: 128, 128>}, {transform_indices = @transform_1, window_bounds = array<i64: 128, 128>}, {transform_indices = @transform_2, window_bounds = array<i64: 128, 128>}, {transform_indices = @transform_3, window_bounds = array<i64: 1, 128>}, {transform_indices = @transform_4, window_bounds = array<i64: 128, 128>}]} {
    %c0 = arith.constant 0 : index
    %c0_0 = arith.constant 0 : index
    %0 = vector.load %arg2[%c0, %c0_0] : memref<128x128xf32, #tpu.memory_space<vmem>>, vector<128x128xf32>
    %c0_1 = arith.constant 0 : index
    %c0_2 = arith.constant 0 : index
    %1 = vector.load %arg3[%c0_1, %c0_2] : memref<128x128xi32, #tpu.memory_space<vmem>>, vector<128x128xi32>
    %c-2147483648_i32 = arith.constant -2147483648 : i32
    %2 = vector.broadcast %c-2147483648_i32 : i32 to vector<128x128xi32>
    %3 = arith.cmpi uge, %1, %2 : vector<128x128xi32>
    %cst = arith.constant 0.000000e+00 : f32
    %4 = vector.broadcast %cst : f32 to vector<128x128xf32>
    %5 = arith.select %3, %0, %4 : vector<128x128xi1>, vector<128x128xf32>
    %c0_3 = arith.constant 0 : index
    %c0_4 = arith.constant 0 : index
    %6 = vector.load %arg4[%c0_3, %c0_4] : memref<128x128xf32, #tpu.memory_space<vmem>>, vector<128x128xf32>
    %cst_5 = arith.constant dense<0.000000e+00> : vector<128x128xf32>
    %7 = tpu.matmul %5, %6, %cst_5 {dimension_numbers = #tpu.dot_dimension_numbers<[1], [1], [0], [0], [0, 0, 1, 0], [], []>} : vector<128x128xf32>, vector<128x128xf32>, vector<128x128xf32> -> vector<128x128xf32>
    %cst_6 = arith.constant 2.000000e+00 : f32
    %8 = vector.broadcast %cst_6 : f32 to vector<128x128xf32>
    %9 = arith.mulf %7, %8 : vector<128x128xf32>
    %c0_7 = arith.constant 0 : index
    %c0_8 = arith.constant 0 : index
    %10 = vector.load %arg5[%c0_7, %c0_8] : memref<1x128xf32, #tpu.memory_space<vmem>>, vector<1x128xf32>
    %11 = vector.broadcast %10 : vector<1x128xf32> to vector<128x128xf32>
    %12 = arith.addf %9, %11 : vector<128x128xf32>
    %cst_9 = arith.constant 0.000000e+00 : f32
    %13 = vector.broadcast %cst_9 : f32 to vector<128x128xf32>
    %14 = arith.maximumf %12, %13 : vector<128x128xf32>
    %c0_10 = arith.constant 0 : index
    %c0_11 = arith.constant 0 : index
    %15 = vector.load %arg6[%c0_10, %c0_11] : memref<128x128xf32, #tpu.memory_space<vmem>>, vector<128x128xf32>
    tpu.vector_store %arg6[%c0_10, %c0_11], %14 {strides = array<i32>} : memref<128x128xf32, #tpu.memory_space<vmem>>, vector<128x128xf32>,
    return
  }
  func.func @transform_0(%arg0: i32, %arg1: i32) -> (i32, i32) {
    %c0_i32 = arith.constant 0 : i32
    %c0_i32_0 = arith.constant 0 : i32
    return %arg0, %c0_i32 : i32, i32
  }
  func.func @transform_1(%arg0: i32, %arg1: i32) -> (i32, i32) {
    %c0_i32 = arith.constant 0 : i32
    %c0_i32_0 = arith.constant 0 : i32
    return %arg0, %c0_i32 : i32, i32
  }
  func.func @transform_2(%arg0: i32, %arg1: i32) -> (i32, i32) {
    %c0_i32 = arith.constant 0 : i32
    %c0_i32_0 = arith.constant 0 : i32
    return %arg1, %c0_i32 : i32, i32
  }
  func.func @transform_3(%arg0: i32, %arg1: i32) -> (i32, i32) {
    %c0_i32 = arith.constant 0 : i32
    %c0_i32_0 = arith.constant 0 : i32
    return %c0_i32, %arg1 : i32, i32
  }
  func.func @transform_4(%arg0: i32, %arg1: i32) -> (i32, i32) {
    %c0_i32 = arith.constant 0 : i32
    return %arg0, %arg1 : i32, i32
  }
}

</mosaic_0001>

<llo_original>
// kernel: tpu_custom_call.1
$region0: #{tpu_custom_call.1}
  #allocation0 [shape = 'u32[]', space=smem, size = 0x4, offset = 0x4, fixed_abs, tag = 'smem constant byte address 0x4 - core index']
  #allocation1 [shape = 'u32[144,128]{1,0:T(1,128)}', space=vmem, size = 0x12000, scoped, tag = 'internal scratch']
  %s0 = inlined_call_operand.hbm [shape: f32[256,128], index: 0, kind: input, shape index: {}]
  %s1 = inlined_call_operand.hbm [shape: u32[256,128], index: 1, kind: input, shape index: {}]
  %s2 = inlined_call_operand.hbm [shape: f32[256,128], index: 2, kind: input, shape index: {}]
  %s3 = inlined_call_operand.vmem [shape: f32[1,256], index: 3, kind: input, shape index: {}]
  %s4 = inlined_call_operand.hbm [shape: f32[256,256], index: 4, kind: output, shape index: {}]
  %s5 = sld [smem:[#allocation0]]
  $region61: #{tpu_custom_call.1} parent=0
    _
  %s7 = ssub.s32 1, %s5
  %s8 = scalar_select 0, %s7, %s5
  $region1: #{tpu_custom_call.1} parent=0
    #allocation2 [shape = 'u8[131072]{0}', space=vmem, size = 0x20000, scoped, tag = 'input window, operand 0']
    #allocation3 [shape = 's32[2]{0}', space=sflag, size = 0x8, scoped, tag = 'scoped memory for tpu_custom_call.1']
    #allocation4 [shape = 's32[2]{0}', space=sflag, size = 0x8, scoped, tag = 'scoped memory for tpu_custom_call.1']
    #allocation5 [shape = 'u8[131072]{0}', space=vmem, size = 0x20000, scoped, tag = 'input window, operand 1']
    #allocation6 [shape = 's32[2]{0}', space=sflag, size = 0x8, scoped, tag = 'scoped memory for tpu_custom_call.1']
    #allocation7 [shape = 'u8[131072]{0}', space=vmem, size = 0x20000, scoped, tag = 'input window, operand 2']
    #allocation8 [shape = 'u8[131072]{0}', space=vmem, size = 0x20000, scoped, tag = 'output window, operand 0']
    %9 = vsyncpa [#allocation3], 0
    %s10 = scalar_lea.sflag [#allocation3], 1
    %11 = vsyncpa %s10, 0
    %12 = vsyncpa [#allocation6], 0
    %s13 = scalar_lea.sflag [#allocation6], 1
    %14 = vsyncpa %s13, 0
    %15 = vsyncpa [#allocation4], 0
    %s16 = scalar_lea.sflag [#allocation4], 1
    %17 = vsyncpa %s16, 0
    loop: start=0, step=1, limit=6
    $region2: #{tpu_custom_call.1} parent=1 // loop_pre_header
      _
    $region3: #{tpu_custom_call.1} parent=1 // loop_header
      %s19 = sphi 0, %s23
      %p20 = scmp.ge.s32.totalorder %s19, 6
      %s26 = sphi 0, %s38
      %s27 = sphi 0, %s34
      %s28 = sphi 0, %s26
      %s29 = sphi 0, %s27
      %s30 = sphi 0, %s28
      %s31 = sphi 0, %s29
      %s41 = sphi 0, %s43
      %s44 = sphi 0, %s41
      %s45 = sphi 0, %s44
      %s61 = sphi 0, %s45
      %s67 = sphi 0, %s69
      %s70 = sphi 0, %s67
      %s71 = sphi 0, %s70
      %s87 = sphi 0, %s71
      %s93 = sphi 0, %s95
      %s96 = sphi 0, %s93
      %s97 = sphi 0, %s96
      %s113 = sphi 0, %s97
      %s119 = sphi 0, %s121
      %s122 = sphi 0, %s119
      %s123 = sphi 0, %s122
      %s139 = sphi 0, %s123
      %s147 = sphi 0, %s149
      %s150 = sphi 0, %s147
      %s151 = sphi 0, %s150
      %s167 = sphi 0, %s151
    $region4: #{tpu_custom_call.1} parent=1 // loop_header_branch
      %22 = sbr.rel (%p20) target = $region8
    $region5: #{tpu_custom_call.1} parent=1 // loop_body
      %s24 = ssub.s32 %s19, 1
      %s25 = ssub.s32 %s19, 2
      %s32 = sadd.s32 1, %s27
      %p33 = scmp.ge.s32.totalorder %s32, 2
      %s34 = scalar_select %p33, 0, %s32
      %s35 = sadd.s32 1, %s26
      %s36 = scalar_select %p33, %s35, %s26
      %p37 = scmp.ge.s32.totalorder %s36, 2
      %s38 = scalar_select %p37, 0, %s36
      %s39 = ssub.s32 %s26, %s38
      %p40 = scmp.eq.s32.totalorder %s39, 0
      %s42 = sadd.s32 %s41, 1
      %s43 = scalar_select %p40, %s41, %s42
      %p46 = pneg %p40
      %p47 = scmp.eq.s32.totalorder %s19, 3
      %p48 = por %p46, %p47
      %p49 = scmp.ne.s32.totalorder %s41, %s44
      %p50 = scmp.eq.s32.totalorder %s19, 0
      %p51 = por %p49, %p50
      %p52 = scmp.ne.s32.totalorder %s41, %s44
      %p53 = scmp.eq.s32.totalorder %s24, 3
      %p54 = por %p52, %p53
      %p55 = scmp.ne.s32.totalorder %s44, %s45
      %p56 = scmp.eq.s32.totalorder %s24, 0
      %p57 = por %p55, %p56
      %p58 = scmp.ne.s32.totalorder %s44, %s45
      %p59 = scmp.eq.s32.totalorder %s25, 3
      %p60 = por %p58, %p59
      %p62 = scmp.ne.s32.totalorder %s45, %s61
      %p63 = scmp.eq.s32.totalorder %s25, 0
      %p64 = por %p62, %p63
      %s65 = ssub.s32 %s26, %s38
      %p66 = scmp.eq.s32.totalorder %s65, 0
      %s68 = sadd.s32 %s67, 1
      %s69 = scalar_select %p66, %s67, %s68
      %p72 = pneg %p66
      %p73 = scmp.eq.s32.totalorder %s19, 3
      %p74 = por %p72, %p73
      %p75 = scmp.ne.s32.totalorder %s67, %s70
      %p76 = scmp.eq.s32.totalorder %s19, 0
      %p77 = por %p75, %p76
      %p78 = scmp.ne.s32.totalorder %s67, %s70
      %p79 = scmp.eq.s32.totalorder %s24, 3
      %p80 = por %p78, %p79
      %p81 = scmp.ne.s32.totalorder %s70, %s71
      %p82 = scmp.eq.s32.totalorder %s24, 0
      %p83 = por %p81, %p82
      %p84 = scmp.ne.s32.totalorder %s70, %s71
      %p85 = scmp.eq.s32.totalorder %s25, 3
      %p86 = por %p84, %p85
      %p88 = scmp.ne.s32.totalorder %s71, %s87
      %p89 = scmp.eq.s32.totalorder %s25, 0
      %p90 = por %p88, %p89
      %s91 = ssub.s32 %s27, %s34
      %p92 = scmp.eq.s32.totalorder %s91, 0
      %s94 = sadd.s32 %s93, 1
      %s95 = scalar_select %p92, %s93, %s94
      %p98 = pneg %p92
      %p99 = scmp.eq.s32.totalorder %s19, 3
      %p100 = por %p98, %p99
      %p101 = scmp.ne.s32.totalorder %s93, %s96
      %p102 = scmp.eq.s32.totalorder %s19, 0
      %p103 = por %p101, %p102
      %p104 = scmp.ne.s32.totalorder %s93, %s96
      %p105 = scmp.eq.s32.totalorder %s24, 3
      %p106 = por %p104, %p105
      %p107 = scmp.ne.s32.totalorder %s96, %s97
      %p108 = scmp.eq.s32.totalorder %s24, 0
      %p109 = por %p107, %p108
      %p110 = scmp.ne.s32.totalorder %s96, %s97
      %p111 = scmp.eq.s32.totalorder %s25, 3
      %p112 = por %p110, %p111
      %p114 = scmp.ne.s32.totalorder %s97, %s113
      %p115 = scmp.eq.s32.totalorder %s25, 0
      %p116 = por %p114, %p115
      %s117 = ssub.s32 %s27, %s34
      %p118 = scmp.eq.s32.totalorder %s117, 0
      %s120 = sadd.s32 %s119, 1
      %s121 = scalar_select %p118, %s119, %s120
      %p124 = pneg %p118
      %p125 = scmp.eq.s32.totalorder %s19, 3
      %p126 = por %p124, %p125
      %p127 = scmp.ne.s32.totalorder %s119, %s122
      %p128 = scmp.eq.s32.totalorder %s19, 0
      %p129 = por %p127, %p128
      %p130 = scmp.ne.s32.totalorder %s119, %s122
      %p131 = scmp.eq.s32.totalorder %s24, 3
      %p132 = por %p130, %p131
      %p133 = scmp.ne.s32.totalorder %s122, %s123
      %p134 = scmp.eq.s32.totalorder %s24, 0
      %p135 = por %p133, %p134
      %p136 = scmp.ne.s32.totalorder %s122, %s123
      %p137 = scmp.eq.s32.totalorder %s25, 3
      %p138 = por %p136, %p137
      %p140 = scmp.ne.s32.totalorder %s123, %s139
      %p141 = scmp.eq.s32.totalorder %s25, 0
      %p142 = por %p140, %p141
      %s143 = ssub.s32 %s26, %s38
      %s144 = ssub.s32 %s27, %s34
      %s145 = sor.u32 %s143, %s144
      %p146 = scmp.eq.s32.totalorder %s145, 0
      %s148 = sadd.s32 %s147, 1
      %s149 = scalar_select %p146, %s147, %s148
      %p152 = pneg %p146
      %p153 = scmp.eq.s32.totalorder %s19, 3
      %p154 = por %p152, %p153
      %p155 = scmp.ne.s32.totalorder %s147, %s150
      %p156 = scmp.eq.s32.totalorder %s19, 0
      %p157 = por %p155, %p156
      %p158 = scmp.ne.s32.totalorder %s147, %s150
      %p159 = scmp.eq.s32.totalorder %s24, 3
      %p160 = por %p158, %p159
      %p161 = scmp.ne.s32.totalorder %s150, %s151
      %p162 = scmp.eq.s32.totalorder %s24, 0
      %p163 = por %p161, %p162
      %p164 = scmp.ne.s32.totalorder %s150, %s151
      %p165 = scmp.eq.s32.totalorder %s25, 3
      %p166 = por %p164, %p165
      %p168 = scmp.ne.s32.totalorder %s151, %s167
      %p169 = scmp.eq.s32.totalorder %s25, 0
      %p170 = por %p168, %p169
      %p171 = scmp.le.s32.totalorder 1, %s19
      %p172 = scmp.lt.s32.totalorder %s19, 5
      %p173 = pnand %p171, %p172
      %p174 = pneg %p173
      // Predicated region
      $region9: #{tpu_custom_call.1} parent=5 // pred_check
        _
      $region10: #{tpu_custom_call.1} parent=5 // pred_check_branch
        %176 = sbr.rel (%p173) target = $region12
      $region11: #{tpu_custom_call.1} parent=5 // pred_region
        %s177 = ssub.s32 %s19, 1
      $region12: #{tpu_custom_call.1} parent=5 // pred_fallthru
        _
      %p178 = scmp.lt.s32.totalorder %s19, 4
      // Predicated region
      $region13: #{tpu_custom_call.1} parent=5 // pred_check
        %p179 = pneg %p178
      $region14: #{tpu_custom_call.1} parent=5 // pred_check_branch
        %181 = sbr.rel (%p179) target = $region16
      $region15: #{tpu_custom_call.1} parent=5 // pred_region
        // Predicated region
        $region17: #{tpu_custom_call.1} parent=15 // pred_check
          %p182 = pneg %p51
        $region18: #{tpu_custom_call.1} parent=15 // pred_check_branch
          %184 = sbr.rel (%p182) target = $region20
        $region19: #{tpu_custom_call.1} parent=15 // pred_region
          %s185 = sand.u32 %s41, 1
          %s186 = scalar_lea.sflag [#allocation3], %s185
          %s187 = sand.u32 %s41, 1
          %s188 = smul.addr %s187, 128
          %s189 = scalar_lea.vmem [#allocation2], %s188
          %s190 = smul.u32 16, %s26
          %s192 = ssub.s32 2048, 2048
          %193 = vsyncadd %s186, %s192
          %s194 = smul.addr %s190, 128
          %s195 = scalar_lea.hbm %s0, %s194
          %s196 = sshll.u32 %s189, 4
          %s197 = int_to_ptr.vmem [resolvable:$true] %s196
          %202 = dma.hbm_to_vmem [thread:$0]  %s195, 2048, %s197, %s186, 128, 128, 8
        $region20: #{tpu_custom_call.1} parent=15 // pred_fallthru
          _
        // Predicated region
        $region21: #{tpu_custom_call.1} parent=15 // pred_check
          %p203 = pneg %p77
        $region22: #{tpu_custom_call.1} parent=15 // pred_check_branch
          %205 = sbr.rel (%p203) target = $region24
        $region23: #{tpu_custom_call.1} parent=15 // pred_region
          %s206 = sand.u32 %s19, 1
          %s207 = scalar_lea.sflag [#allocation6], %s206
          %s208 = sand.u32 %s67, 1
          %s209 = smul.addr %s208, 128
          %s210 = scalar_lea.vmem [#allocation5], %s209
          %s211 = smul.u32 16, %s26
          %s213 = ssub.s32 2048, 2048
          %214 = vsyncadd %s207, %s213
          %s215 = smul.addr %s211, 128
          %s216 = scalar_lea.hbm %s1, %s215
          %s217 = sshll.u32 %s210, 4
          %s218 = int_to_ptr.vmem [resolvable:$true] %s217
          %223 = dma.hbm_to_vmem [thread:$0]  %s216, 2048, %s218, %s207, 128, 128, 8
        $region24: #{tpu_custom_call.1} parent=15 // pred_fallthru
          _
        // Predicated region
        $region25: #{tpu_custom_call.1} parent=15 // pred_check
          %p224 = pneg %p103
        $region26: #{tpu_custom_call.1} parent=15 // pred_check_branch
          %226 = sbr.rel (%p224) target = $region28
        $region27: #{tpu_custom_call.1} parent=15 // pred_region
          %s227 = sand.u32 %s19, 1
          %s228 = scalar_lea.sflag [#allocation6], %s227
          %s229 = sand.u32 %s93, 1
          %s230 = smul.addr %s229, 128
          %s231 = scalar_lea.vmem [#allocation7], %s230
          %s232 = smul.u32 16, %s27
          %s234 = ssub.s32 2048, 2048
          %235 = vsyncadd %s228, %s234
          %s236 = smul.addr %s232, 128
          %s237 = scalar_lea.hbm %s2, %s236
          %s238 = sshll.u32 %s231, 4
          %s239 = int_to_ptr.vmem [resolvable:$true] %s238
          %244 = dma.hbm_to_vmem [thread:$0]  %s237, 2048, %s239, %s228, 128, 128, 8
        $region28: #{tpu_custom_call.1} parent=15 // pred_fallthru
          _
        // Predicated region
        $region29: #{tpu_custom_call.1} parent=15 // pred_check
          %p245 = pneg %p129
        $region30: #{tpu_custom_call.1} parent=15 // pred_check_branch
          %247 = sbr.rel (%p245) target = $region32
        $region31: #{tpu_custom_call.1} parent=15 // pred_region
          %p248 = scmp.lt.s32.totalorder %s27, 1
          %s249 = scalar_select %p248, %s27, 1
          %s250 = scalar_lea.vmem %s3, %s249
        $region32: #{tpu_custom_call.1} parent=15 // pred_fallthru
          _
      $region16: #{tpu_custom_call.1} parent=5 // pred_fallthru
        _
      %p251 = scmp.le.s32.totalorder 1, %s19
      %p252 = scmp.lt.s32.totalorder %s19, 5
      %p253 = pnand %p251, %p252
      %p254 = pneg %p253
      // Predicated region
      $region33: #{tpu_custom_call.1} parent=5 // pred_check
        _
      $region34: #{tpu_custom_call.1} parent=5 // pred_check_branch
        %256 = sbr.rel (%p253) target = $region36
      $region35: #{tpu_custom_call.1} parent=5 // pred_region
        %s257 = ssub.s32 %s19, 1
        %s258 = sand.u32 %s44, 1
        %s259 = scalar_lea.sflag [#allocation3], %s258
        %s260 = sand.u32 %s44, 1
        %s261 = smul.addr %s260, 128
        %s262 = scalar_lea.vmem [#allocation2], %s261
        // Predicated region
        $region37: #{tpu_custom_call.1} parent=35 // pred_check
          %p263 = pneg %p57
        $region38: #{tpu_custom_call.1} parent=35 // pred_check_branch
          %265 = sbr.rel (%p263) target = $region40
        $region39: #{tpu_custom_call.1} parent=35 // pred_region
          %266 = dma.done %s259, 2048
        $region40: #{tpu_custom_call.1} parent=35 // pred_fallthru
          _
        %s267 = sand.u32 %s24, 1
        %s268 = scalar_lea.sflag [#allocation6], %s267
        %s269 = sand.u32 %s70, 1
        %s270 = smul.addr %s269, 128
        %s271 = scalar_lea.vmem [#allocation5], %s270
        // Predicated region
        $region41: #{tpu_custom_call.1} parent=35 // pred_check
          %p272 = pneg %p83
        $region42: #{tpu_custom_call.1} parent=35 // pred_check_branch
          %274 = sbr.rel (%p272) target = $region44
        $region43: #{tpu_custom_call.1} parent=35 // pred_region
          %275 = dma.done %s268, 2048
        $region44: #{tpu_custom_call.1} parent=35 // pred_fallthru
          _
        %s276 = sand.u32 %s24, 1
        %s277 = scalar_lea.sflag [#allocation6], %s276
        %s278 = sand.u32 %s96, 1
        %s279 = smul.addr %s278, 128
        %s280 = scalar_lea.vmem [#allocation7], %s279
        // Predicated region
        $region45: #{tpu_custom_call.1} parent=35 // pred_check
          %p281 = pneg %p109
        $region46: #{tpu_custom_call.1} parent=35 // pred_check_branch
          %283 = sbr.rel (%p281) target = $region48
        $region47: #{tpu_custom_call.1} parent=35 // pred_region
          %284 = dma.done %s277, 2048
        $region48: #{tpu_custom_call.1} parent=35 // pred_fallthru
          _
        %s285 = sand.u32 %s44, 1
        %s286 = scalar_lea.sflag [#allocation3], %s285
        %s287 = sand.u32 %s44, 1
        %s288 = smul.addr %s287, 128
        %s289 = scalar_lea.vmem [#allocation2], %s288
        %p290 = pneg %p57
        %p291 = pneg %p54
        %s292 = sand.u32 %s24, 1
        %s293 = scalar_lea.sflag [#allocation6], %s292
        %s294 = sand.u32 %s70, 1
        %s295 = smul.addr %s294, 128
        %s296 = scalar_lea.vmem [#allocation5], %s295
        %p297 = pneg %p83
        %p298 = pneg %p80
        %s299 = sand.u32 %s24, 1
        %s300 = scalar_lea.sflag [#allocation6], %s299
        %s301 = sand.u32 %s96, 1
        %s302 = smul.addr %s301, 128
        %s303 = scalar_lea.vmem [#allocation7], %s302
        %p304 = pneg %p109
        %p305 = pneg %p106
        %p306 = scmp.lt.s32.totalorder %s29, 1
        %s307 = scalar_select %p306, %s29, 1
        %s308 = scalar_lea.vmem %s3, %s307
        %p309 = pneg %p135
        %p310 = pneg %p132
        %p311 = pneg %p163
        %p312 = pneg %p160
        %s313 = sand.u32 %s150, 1
        %s314 = scalar_lea.sflag [#allocation4], %s313
        %s315 = sand.u32 %s150, 1
        %s316 = smul.addr %s315, 128
        %s317 = scalar_lea.vmem [#allocation8], %s316
        %s318 = smul.u32 16, %s28
        %s319 = smul.u32 16, %s28
        %s320 = smul.u32 16, %s29
        %p321 = scmp.lt.s32.totalorder %s29, 1
        %s322 = scalar_select %p321, %s29, 1
        %s323 = scalar_lea.vmem %s3, %s322
        %s324 = smul.u32 16, %s28
        %v325 = vld [vmem:[%s262] sm:$0xff]
        %v326 = vld [vmem:[%s262 + $0x8] sm:$0xff]
        %v327 = vld [vmem:[%s262 + $0x10] sm:$0xff]
        %v328 = vld [vmem:[%s262 + $0x18] sm:$0xff]
        %v329 = vld [vmem:[%s262 + $0x20] sm:$0xff]
        %v330 = vld [vmem:[%s262 + $0x28] sm:$0xff]
        %v331 = vld [vmem:[%s262 + $0x30] sm:$0xff]
        %v332 = vld [vmem:[%s262 + $0x38] sm:$0xff]
        %v333 = vld [vmem:[%s262 + $0x40] sm:$0xff]
        %v334 = vld [vmem:[%s262 + $0x48] sm:$0xff]
        %v335 = vld [vmem:[%s262 + $0x50] sm:$0xff]
        %v336 = vld [vmem:[%s262 + $0x58] sm:$0xff]
        %v337 = vld [vmem:[%s262 + $0x60] sm:$0xff]
        %v338 = vld [vmem:[%s262 + $0x68] sm:$0xff]
        %v339 = vld [vmem:[%s262 + $0x70] sm:$0xff]
        %v340 = vld [vmem:[%s262 + $0x78] sm:$0xff]
        %v341 = vld [vmem:[%s271] sm:$0xff]
        %v342 = vld [vmem:[%s271 + $0x8] sm:$0xff]
        %v343 = vld [vmem:[%s271 + $0x10] sm:$0xff]
        %v344 = vld [vmem:[%s271 + $0x18] sm:$0xff]
        %v345 = vld [vmem:[%s271 + $0x20] sm:$0xff]
        %v346 = vld [vmem:[%s271 + $0x28] sm:$0xff]
        %v347 = vld [vmem:[%s271 + $0x30] sm:$0xff]
        %v348 = vld [vmem:[%s271 + $0x38] sm:$0xff]
        %v349 = vld [vmem:[%s271 + $0x40] sm:$0xff]
        %v350 = vld [vmem:[%s271 + $0x48] sm:$0xff]
        %v351 = vld [vmem:[%s271 + $0x50] sm:$0xff]
        %v352 = vld [vmem:[%s271 + $0x58] sm:$0xff]
        %v353 = vld [vmem:[%s271 + $0x60] sm:$0xff]
        %v354 = vld [vmem:[%s271 + $0x68] sm:$0xff]
        %v355 = vld [vmem:[%s271 + $0x70] sm:$0xff]
        %v356 = vld [vmem:[%s271 + $0x78] sm:$0xff]
        %vm357 = vcmp.ge.u32.totalorder %v341, 2147483648
        %vm358 = vcmp.ge.u32.totalorder %v342, 2147483648
        %vm359 = vcmp.ge.u32.totalorder %v343, 2147483648
        %vm360 = vcmp.ge.u32.totalorder %v344, 2147483648
        %vm361 = vcmp.ge.u32.totalorder %v345, 2147483648
        %vm362 = vcmp.ge.u32.totalorder %v346, 2147483648
        %vm363 = vcmp.ge.u32.totalorder %v347, 2147483648
        %vm364 = vcmp.ge.u32.totalorder %v348, 2147483648
        %vm365 = vcmp.ge.u32.totalorder %v349, 2147483648
        %vm366 = vcmp.ge.u32.totalorder %v350, 2147483648
        %vm367 = vcmp.ge.u32.totalorder %v351, 2147483648
        %vm368 = vcmp.ge.u32.totalorder %v352, 2147483648
        %vm369 = vcmp.ge.u32.totalorder %v353, 2147483648
        %vm370 = vcmp.ge.u32.totalorder %v354, 2147483648
        %vm371 = vcmp.ge.u32.totalorder %v355, 2147483648
        %vm372 = vcmp.ge.u32.totalorder %v356, 2147483648
        %v373 = vsel %vm357, %v325, 0.0
        %v374 = vsel %vm358, %v326, 0.0
        %v375 = vsel %vm359, %v327, 0.0
        %v376 = vsel %vm360, %v328, 0.0
        %v377 = vsel %vm361, %v329, 0.0
        %v378 = vsel %vm362, %v330, 0.0
        %v379 = vsel %vm363, %v331, 0.0
        %v380 = vsel %vm364, %v332, 0.0
        %v381 = vsel %vm365, %v333, 0.0
        %v382 = vsel %vm366, %v334, 0.0
        %v383 = vsel %vm367, %v335, 0.0
        %v384 = vsel %vm368, %v336, 0.0
        %v385 = vsel %vm369, %v337, 0.0
        %v386 = vsel %vm370, %v338, 0.0
        %v387 = vsel %vm371, %v339, 0.0
        %v388 = vsel %vm372, %v340, 0.0
        %v389 = vld [vmem:[%s280] sm:$0xff]
        %v390 = vld [vmem:[%s280 + $0x8] sm:$0xff]
        %v391 = vld [vmem:[%s280 + $0x10] sm:$0xff]
        %v392 = vld [vmem:[%s280 + $0x18] sm:$0xff]
        %v393 = vld [vmem:[%s280 + $0x20] sm:$0xff]
        %v394 = vld [vmem:[%s280 + $0x28] sm:$0xff]
        %v395 = vld [vmem:[%s280 + $0x30] sm:$0xff]
        %v396 = vld [vmem:[%s280 + $0x38] sm:$0xff]
        %v397 = vld [vmem:[%s280 + $0x40] sm:$0xff]
        %v398 = vld [vmem:[%s280 + $0x48] sm:$0xff]
        %v399 = vld [vmem:[%s280 + $0x50] sm:$0xff]
        %v400 = vld [vmem:[%s280 + $0x58] sm:$0xff]
        %v401 = vld [vmem:[%s280 + $0x60] sm:$0xff]
        %v402 = vld [vmem:[%s280 + $0x68] sm:$0xff]
        %v403 = vld [vmem:[%s280 + $0x70] sm:$0xff]
        %v404 = vld [vmem:[%s280 + $0x78] sm:$0xff]
        %405 = vmatprep.subr.mxu0 0.0
        %406 = vmatpush1.xpose.msra.mxu0 %v389
        %407 = vmatprep.subr.mxu0 0.0
        %408 = vmatpush1.xpose.msra.mxu0 %v390
        %409 = vmatprep.subr.mxu0 0.0
        %410 = vmatpush1.xpose.msra.mxu0 %v391
        %411 = vmatprep.subr.mxu0 0.0
        %412 = vmatpush1.xpose.msra.mxu0 %v392
        %413 = vmatprep.subr.mxu0 0.0
        %414 = vmatpush1.xpose.msra.mxu0 %v393
        %415 = vmatprep.subr.mxu0 0.0
        %416 = vmatpush1.xpose.msra.mxu0 %v394
        %417 = vmatprep.subr.mxu0 0.0
        %418 = vmatpush1.xpose.msra.mxu0 %v395
        %419 = vmatprep.subr.mxu0 0.0
        %420 = vmatpush1.xpose.msra.mxu0 %v396
        %421 = vmatprep.subr.mxu0 0.0
        %422 = vmatpush1.xpose.msra.mxu0 %v397
        %423 = vmatprep.subr.mxu0 0.0
        %424 = vmatpush1.xpose.msra.mxu0 %v398
        %425 = vmatprep.subr.mxu0 0.0
        %426 = vmatpush1.xpose.msra.mxu0 %v399
        %427 = vmatprep.subr.mxu0 0.0
        %428 = vmatpush1.xpose.msra.mxu0 %v400
        %429 = vmatprep.subr.mxu0 0.0
        %430 = vmatpush1.xpose.msra.mxu0 %v401
        %431 = vmatprep.subr.mxu0 0.0
        %432 = vmatpush1.xpose.msra.mxu0 %v402
        %433 = vmatprep.subr.mxu0 0.0
        %434 = vmatpush1.xpose.msra.mxu0 %v403
        %435 = vmatprep.subr.mxu0 0.0
        %436 = vmatpush1.xpose.msra.mxu0 %v404
        %437 = vmatprep.subr.mxu0 0.0
        %438 = vmatpush1.xpose.msra.mxu0 0.0
        %439 = vmatprep.subr.mxu0 0.0
        %440 = vmatpush1.xpose.msra.mxu0 0.0
        %441 = vmatprep.subr.mxu0 0.0
        %442 = vmatpush1.xpose.msra.mxu0 0.0
        %443 = vmatprep.subr.mxu0 0.0
        %444 = vmatpush1.xpose.msra.mxu0 0.0
        %445 = vmatprep.subr.mxu0 0.0
        %446 = vmatpush1.xpose.msra.mxu0 0.0
        %447 = vmatprep.subr.mxu0 0.0
        %448 = vmatpush1.xpose.msra.mxu0 0.0
        %449 = vmatprep.subr.mxu0 0.0
        %450 = vmatpush1.xpose.msra.mxu0 0.0
        %451 = vmatprep.subr.mxu0 0.0
        %452 = vmatpush1.xpose.msra.mxu0 0.0
        %453 = vmatprep.subr.mxu0 0.0
        %454 = vmatpush1.xpose.msra.mxu0 0.0
        %455 = vmatprep.subr.mxu0 0.0
        %456 = vmatpush1.xpose.msra.mxu0 0.0
        %457 = vmatprep.subr.mxu0 0.0
        %458 = vmatpush1.xpose.msra.mxu0 0.0
        %459 = vmatprep.subr.mxu0 0.0
        %460 = vmatpush1.xpose.msra.mxu0 0.0
        %461 = vmatprep.subr.mxu0 0.0
        %462 = vmatpush1.xpose.msra.mxu0 0.0
        %463 = vmatprep.subr.mxu0 0.0
        %464 = vmatpush1.xpose.msra.mxu0 0.0
        %465 = vmatprep.subr.mxu0 0.0
        %466 = vmatpush1.xpose.msra.mxu0 0.0
        %467 = vmatprep.subr.mxu0 0.0
        %468 = vmatpush1.xpose.msra.mxu0 0.0
        %469 = vmatprep.mubr.f32.mxu0 0.0
        %470 = vmatmul.mubr.f32.gmra.mrb[0].mxu0 %v373
        %v471 = vpop.f32.mrb[0].mxu0
        %v472 = vadd.f32 0.0, %v471
        %v473 = vpop.f32.mrb[0].mxu0
        %474 = vmatprep.mubr.f32.mxu0 0.0
        %475 = vmatmul.mubr.f32.gmra.mrb[0].mxu0 %v374
        %v476 = vpop.f32.mrb[0].mxu0
        %v477 = vadd.f32 0.0, %v476
        %v478 = vpop.f32.mrb[0].mxu0
        %479 = vmatprep.mubr.f32.mxu0 0.0
        %480 = vmatmul.mubr.f32.gmra.mrb[0].mxu0 %v375
        %v481 = vpop.f32.mrb[0].mxu0
        %v482 = vadd.f32 0.0, %v481
        %v483 = vpop.f32.mrb[0].mxu0
        %484 = vmatprep.mubr.f32.mxu0 0.0
        %485 = vmatmul.mubr.f32.gmra.mrb[0].mxu0 %v376
        %v486 = vpop.f32.mrb[0].mxu0
        %v487 = vadd.f32 0.0, %v486
        %v488 = vpop.f32.mrb[0].mxu0
        %489 = vmatprep.mubr.f32.mxu0 0.0
        %490 = vmatmul.mubr.f32.gmra.mrb[0].mxu0 %v377
        %v491 = vpop.f32.mrb[0].mxu0
        %v492 = vadd.f32 0.0, %v491
        %v493 = vpop.f32.mrb[0].mxu0
        %494 = vmatprep.mubr.f32.mxu0 0.0
        %495 = vmatmul.mubr.f32.gmra.mrb[0].mxu0 %v378
        %v496 = vpop.f32.mrb[0].mxu0
        %v497 = vadd.f32 0.0, %v496
        %v498 = vpop.f32.mrb[0].mxu0
        %499 = vmatprep.mubr.f32.mxu0 0.0
        %500 = vmatmul.mubr.f32.gmra.mrb[0].mxu0 %v379
        %v501 = vpop.f32.mrb[0].mxu0
        %v502 = vadd.f32 0.0, %v501
        %v503 = vpop.f32.mrb[0].mxu0
        %504 = vmatprep.mubr.f32.mxu0 0.0
        %505 = vmatmul.mubr.f32.gmra.mrb[0].mxu0 %v380
        %v506 = vpop.f32.mrb[0].mxu0
        %v507 = vadd.f32 0.0, %v506
        %v508 = vpop.f32.mrb[0].mxu0
        %509 = vmatprep.mubr.f32.mxu0 0.0
        %510 = vmatmul.mubr.f32.gmra.mrb[0].mxu0 %v381
        %v511 = vpop.f32.mrb[0].mxu0
        %v512 = vadd.f32 0.0, %v511
        %v513 = vpop.f32.mrb[0].mxu0
        %514 = vmatprep.mubr.f32.mxu0 0.0
        %515 = vmatmul.mubr.f32.gmra.mrb[0].mxu0 %v382
        %v516 = vpop.f32.mrb[0].mxu0
        %v517 = vadd.f32 0.0, %v516
        %v518 = vpop.f32.mrb[0].mxu0
        %519 = vmatprep.mubr.f32.mxu0 0.0
        %520 = vmatmul.mubr.f32.gmra.mrb[0].mxu0 %v383
        %v521 = vpop.f32.mrb[0].mxu0
        %v522 = vadd.f32 0.0, %v521
        %v523 = vpop.f32.mrb[0].mxu0
        %524 = vmatprep.mubr.f32.mxu0 0.0
        %525 = vmatmul.mubr.f32.gmra.mrb[0].mxu0 %v384
        %v526 = vpop.f32.mrb[0].mxu0
        %v527 = vadd.f32 0.0, %v526
        %v528 = vpop.f32.mrb[0].mxu0
        %529 = vmatprep.mubr.f32.mxu0 0.0
        %530 = vmatmul.mubr.f32.gmra.mrb[0].mxu0 %v385
        %v531 = vpop.f32.mrb[0].mxu0
        %v532 = vadd.f32 0.0, %v531
        %v533 = vpop.f32.mrb[0].mxu0
        %534 = vmatprep.mubr.f32.mxu0 0.0
        %535 = vmatmul.mubr.f32.gmra.mrb[0].mxu0 %v386
        %v536 = vpop.f32.mrb[0].mxu0
        %v537 = vadd.f32 0.0, %v536
        %v538 = vpop.f32.mrb[0].mxu0
        %539 = vmatprep.mubr.f32.mxu0 0.0
        %540 = vmatmul.mubr.f32.gmra.mrb[0].mxu0 %v387
        %v541 = vpop.f32.mrb[0].mxu0
        %v542 = vadd.f32 0.0, %v541
        %v543 = vpop.f32.mrb[0].mxu0
        %544 = vmatprep.mubr.f32.mxu0 0.0
        %545 = vmatmul.mubr.f32.gmra.mrb[0].mxu0 %v388
        %v546 = vpop.f32.mrb[0].mxu0
        %v547 = vadd.f32 0.0, %v546
        %v548 = vpop.f32.mrb[0].mxu0
        %549 = vdwg.mxu0
        %v550 = vmul.f32 %v472, 2.0
        %v551 = vmul.f32 %v477, 2.0
        %v552 = vmul.f32 %v482, 2.0
        %v553 = vmul.f32 %v487, 2.0
        %v554 = vmul.f32 %v492, 2.0
        %v555 = vmul.f32 %v497, 2.0
        %v556 = vmul.f32 %v502, 2.0
        %v557 = vmul.f32 %v507, 2.0
        %v558 = vmul.f32 %v512, 2.0
        %v559 = vmul.f32 %v517, 2.0
        %v560 = vmul.f32 %v522, 2.0
        %v561 = vmul.f32 %v527, 2.0
        %v562 = vmul.f32 %v532, 2.0
        %v563 = vmul.f32 %v537, 2.0
        %v564 = vmul.f32 %v542, 2.0
        %v565 = vmul.f32 %v547, 2.0
        %v566 = vld [vmem:[%s323] sm:$0x1]
        %v568 = vlaneseq
        %v569 = vshrl.u32 %v568, 7
        %v570 = vsub.s32 0, %v569
        %v571 = vrot.slane %v566, %v570
        %v573 = vadd.f32 %v550, %v571
        %v574 = vadd.f32 %v551, %v571
        %v575 = vadd.f32 %v552, %v571
        %v576 = vadd.f32 %v553, %v571
        %v577 = vadd.f32 %v554, %v571
        %v578 = vadd.f32 %v555, %v571
        %v579 = vadd.f32 %v556, %v571
        %v580 = vadd.f32 %v557, %v571
        %v581 = vadd.f32 %v558, %v571
        %v582 = vadd.f32 %v559, %v571
        %v583 = vadd.f32 %v560, %v571
        %v584 = vadd.f32 %v561, %v571
        %v585 = vadd.f32 %v562, %v571
        %v586 = vadd.f32 %v563, %v571
        %v587 = vadd.f32 %v564, %v571
        %v588 = vadd.f32 %v565, %v571
        %v589 = vmax.f32 %v573, 0.0
        %v590 = vmax.f32 %v574, 0.0
        %v591 = vmax.f32 %v575, 0.0
        %v592 = vmax.f32 %v576, 0.0
        %v593 = vmax.f32 %v577, 0.0
        %v594 = vmax.f32 %v578, 0.0
        %v595 = vmax.f32 %v579, 0.0
        %v596 = vmax.f32 %v580, 0.0
        %v597 = vmax.f32 %v581, 0.0
        %v598 = vmax.f32 %v582, 0.0
        %v599 = vmax.f32 %v583, 0.0
        %v600 = vmax.f32 %v584, 0.0
        %v601 = vmax.f32 %v585, 0.0
        %v602 = vmax.f32 %v586, 0.0
        %v603 = vmax.f32 %v587, 0.0
        %v604 = vmax.f32 %v588, 0.0
        %605 = vst [vmem:[%s317] sm:$0xff] %v589
        %606 = vst [vmem:[%s317 + $0x8] sm:$0xff] %v590
        %607 = vst [vmem:[%s317 + $0x10] sm:$0xff] %v591
        %608 = vst [vmem:[%s317 + $0x18] sm:$0xff] %v592
        %609 = vst [vmem:[%s317 + $0x20] sm:$0xff] %v593
        %610 = vst [vmem:[%s317 + $0x28] sm:$0xff] %v594
        %611 = vst [vmem:[%s317 + $0x30] sm:$0xff] %v595
        %612 = vst [vmem:[%s317 + $0x38] sm:$0xff] %v596
        %613 = vst [vmem:[%s317 + $0x40] sm:$0xff] %v597
        %614 = vst [vmem:[%s317 + $0x48] sm:$0xff] %v598
        %615 = vst [vmem:[%s317 + $0x50] sm:$0xff] %v599
        %616 = vst [vmem:[%s317 + $0x58] sm:$0xff] %v600
        %617 = vst [vmem:[%s317 + $0x60] sm:$0xff] %v601
        %618 = vst [vmem:[%s317 + $0x68] sm:$0xff] %v602
        %619 = vst [vmem:[%s317 + $0x70] sm:$0xff] %v603
        %620 = vst [vmem:[%s317 + $0x78] sm:$0xff] %v604
        %s621 = sand.u32 %s150, 1
        %s622 = scalar_lea.sflag [#allocation4], %s621
        %s623 = sand.u32 %s150, 1
        %s624 = smul.addr %s623, 128
        %s625 = scalar_lea.vmem [#allocation8], %s624
        // Predicated region
        $region49: #{tpu_custom_call.1} parent=35 // pred_check
          %p626 = pneg %p160
        $region50: #{tpu_custom_call.1} parent=35 // pred_check_branch
          %628 = sbr.rel (%p626) target = $region52
        $region51: #{tpu_custom_call.1} parent=35 // pred_region
          %s629 = smul.u32 16, %s28
          %s631 = ssub.s32 2048, 2048
          %632 = vsyncadd %s622, %s631
          %s633 = smul.addr %s629, 2
          %s634 = sadd.s32 %s29, %s633
          %s635 = smul.addr %s634, 128
          %s636 = scalar_lea.hbm %s4, %s635
          %s637 = sshll.u32 %s625, 4
          %s638 = int_to_ptr.vmem [resolvable:$true] %s637
          %643 = dma.vmem_to_hbm [thread:$0]  %s638, 2048, %s636, %s622, 128, 256, 8
        $region52: #{tpu_custom_call.1} parent=35 // pred_fallthru
          _
      $region36: #{tpu_custom_call.1} parent=5 // pred_fallthru
        _
      %p644 = scmp.le.s32.totalorder 2, %s19
      // Predicated region
      $region53: #{tpu_custom_call.1} parent=5 // pred_check
        %p645 = pneg %p644
      $region54: #{tpu_custom_call.1} parent=5 // pred_check_branch
        %647 = sbr.rel (%p645) target = $region56
      $region55: #{tpu_custom_call.1} parent=5 // pred_region
        %s648 = ssub.s32 %s19, 2
        // Predicated region
        $region57: #{tpu_custom_call.1} parent=55 // pred_check
          %p649 = pneg %p166
        $region58: #{tpu_custom_call.1} parent=55 // pred_check_branch
          %651 = sbr.rel (%p649) target = $region60
        $region59: #{tpu_custom_call.1} parent=55 // pred_region
          %s652 = sand.u32 %s151, 1
          %s653 = scalar_lea.sflag [#allocation4], %s652
          %s654 = sand.u32 %s151, 1
          %s655 = smul.addr %s654, 128
          %s656 = scalar_lea.vmem [#allocation8], %s655
          %657 = dma.done %s653, 2048
        $region60: #{tpu_custom_call.1} parent=55 // pred_fallthru
          _
      $region56: #{tpu_custom_call.1} parent=5 // pred_fallthru
        _
    $region6: #{tpu_custom_call.1} parent=1 // loop_footer
      %s23 = sadd.s32 1, %s19
    $region7: #{tpu_custom_call.1} parent=1 // loop_footer_branch
      %18 = sbr.rel target = $region3
    $region8: #{tpu_custom_call.1} parent=1 // loop_exit
      _
    %658 = vsyncpa [#allocation3], 1
    %s659 = scalar_lea.sflag [#allocation3], 1
    %660 = vsyncpa %s659, 1
    %661 = vsyncpa [#allocation6], 1
    %s662 = scalar_lea.sflag [#allocation6], 1
    %663 = vsyncpa %s662, 1
    %664 = vsyncpa [#allocation4], 1
    %s665 = scalar_lea.sflag [#allocation4], 1
    %666 = vsyncpa %s665, 1

</llo_original>
